<compile_context>
chip_gen: v7x
topology: tpu7x:2x2x1
jax: 0.10.0
libtpu: 0.0.40
codegen_flags: <defaults>
</compile_context>

<pallas_src>
import functools

import jax
import jax.numpy as jnp
from jax.experimental import pallas as pl
from jax.experimental.pallas import tpu as pltpu


def _dueling_kernel(x_ref, w1_ref, b1_ref, w2_ref, b2_ref, wh_ref, bh_ref,
                    qpart_ref, advsum_ref, *,
                    activation: str, num_actions: int, batch_size: int,
                    block_b: int):
    """One batch tile of the DuelingQNetwork forward.

    Outputs:
      qpart_ref  : (block_b, A)  f32  value + advantage (global mean NOT yet removed)
      advsum_ref : (1, 8, 128)   f32  this tile's sum(advantage) over *valid* rows,
                                      replicated over an (8,128)-aligned block.
    The scalar global mean (PyTorch `advantage.mean()`) is applied by the
    wrapper, so the batch grid axis stays fully parallel.
    """
    act = (lambda t: jnp.maximum(t, 0.0)) if activation == "relu" else jnp.tanh
    f32 = jnp.float32
    bf16 = jnp.bfloat16

    # Feature MLP: bf16 operands on the MXU, f32 accumulation, f32 bias/act.
    h = jnp.dot(x_ref[...], w1_ref[...], preferred_element_type=f32)
    h = act(h + b1_ref[...])
    h = jnp.dot(h.astype(bf16), w2_ref[...], preferred_element_type=f32)
    h = act(h + b2_ref[...])

    # Fused heads: columns [0, A) = advantage stream, column A = value stream.
    heads = jnp.dot(h.astype(bf16), wh_ref[...], preferred_element_type=f32)
    heads = heads + bh_ref[...]
    adv = heads[:, :num_actions]                        # (block_b, A)
    value = heads[:, num_actions:num_actions + 1]       # (block_b, 1)

    qpart_ref[...] = value + adv

    # Partial sum of advantage over the valid rows of this tile; padding rows
    # are masked so the global mean matches the un-padded batch exactly.
    row = (pl.program_id(0) * block_b
           + jax.lax.broadcasted_iota(jnp.int32, (block_b, 1), 0))
    valid = row < batch_size
    tile_sum = jnp.sum(jnp.where(valid, adv, 0.0))
    advsum_ref[...] = jnp.broadcast_to(tile_sum, advsum_ref.shape)


def dueling_q_forward(x, params, activation: str = "relu", block_b: int = 16):
    """Batched DuelingQNetwork forward. x: (B, input_dim) f32 -> (B, A) f32."""
    if activation not in ("relu", "tanh"):
        raise ValueError("Supported activation functions: 'relu', 'tanh'")

    w1, b1, w2, b2, wv, bv, wa, ba = params
    B, in_dim = x.shape
    A = wa.shape[1]

    # Fuse the two head matmuls: advantage columns first, value column last.
    wh = jnp.concatenate([wa, wv], axis=1)              # (H, A+1)
    bh = jnp.concatenate([ba, bv], axis=1)              # (1, A+1)

    # Batch tiling; weights stay VMEM-resident across the grid.
    tb = block_b
    num_tiles = pl.cdiv(B, tb)
    b_pad = num_tiles * tb
    if b_pad != B:
        x = jnp.pad(x, ((0, b_pad - B), (0, 0)))

    # bf16 operands for the MXU; biases / accumulation / combine stay f32.
    x_bf = x.astype(jnp.bfloat16)
    w1_bf = w1.astype(jnp.bfloat16)
    w2_bf = w2.astype(jnp.bfloat16)
    wh_bf = wh.astype(jnp.bfloat16)

    kernel = functools.partial(
        _dueling_kernel, activation=activation, num_actions=A,
        batch_size=B, block_b=tb)

    def const(shape):
        return pl.BlockSpec(shape, lambda i: (0,) * len(shape))

    q_part, adv_partials = pl.pallas_call(
        kernel,
        grid=(num_tiles,),
        in_specs=[
            pl.BlockSpec((tb, in_dim), lambda i: (i, 0)),   # x tile
            const(w1_bf.shape), const(b1.shape),
            const(w2_bf.shape), const(b2.shape),
            const(wh_bf.shape), const(bh.shape),
        ],
        out_specs=[
            pl.BlockSpec((tb, A), lambda i: (i, 0)),        # value + adv
            pl.BlockSpec((1, 8, 128), lambda i: (i, 0, 0)), # per-tile adv sums
        ],
        out_shape=[
            jax.ShapeDtypeStruct((b_pad, A), jnp.float32),
            jax.ShapeDtypeStruct((num_tiles, 8, 128), jnp.float32),
        ],
        compiler_params=pltpu.CompilerParams(
            dimension_semantics=("parallel",)),
    )(x_bf, w1_bf, b1, w2_bf, b2, wh_bf, bh)

    # Global scalar advantage mean (PyTorch `advantage.mean()`): one tiny
    # follow-up XLA reduce + subtract, exact over the un-padded batch.
    adv_mean = jnp.sum(adv_partials[:, 0, 0]) / jnp.float32(B * A)
    return q_part[:B] - adv_mean


def init_params(key, input_dim, hidden_dims, output_dim):
    """PyTorch-style uniform(+-1/sqrt(fan_in)) init; weights stored (in, out)."""
    sizes = [input_dim] + hidden_dims
    params = []
    for i in range(len(sizes) - 1):
        fan_in, fan_out = sizes[i], sizes[i + 1]
        key, kw, kb = jax.random.split(key, 3)
        bound = 1.0 / jnp.sqrt(jnp.float32(fan_in))
        w = jax.random.uniform(kw, (fan_in, fan_out), jnp.float32, -bound, bound)
        b = jax.random.uniform(kb, (1, fan_out), jnp.float32, -bound, bound)
        params.extend([w, b])
    h_last = sizes[-1]
    bound = 1.0 / jnp.sqrt(jnp.float32(h_last))
    key, kw, kb = jax.random.split(key, 3)
    wv = jax.random.uniform(kw, (h_last, 1), jnp.float32, -bound, bound)
    bv = jax.random.uniform(kb, (1, 1), jnp.float32, -bound, bound)
    key, kw, kb = jax.random.split(key, 3)
    wa = jax.random.uniform(kw, (h_last, output_dim), jnp.float32, -bound, bound)
    ba = jax.random.uniform(kb, (1, output_dim), jnp.float32, -bound, bound)
    params.extend([wv, bv, wa, ba])
    return tuple(params)


def reference_forward(x, params, activation="relu", use_bf16=False):
    """Pure-JAX reference. use_bf16=True mirrors the kernel's mixed precision."""
    w1, b1, w2, b2, wv, bv, wa, ba = params
    act = (lambda t: jnp.maximum(t, 0.0)) if activation == "relu" else jnp.tanh
    if use_bf16:
        def dot(a, b):
            return jnp.dot(a.astype(jnp.bfloat16), b.astype(jnp.bfloat16),
                           preferred_element_type=jnp.float32)
    else:
        def dot(a, b):
            return jnp.dot(a, b)
    h = act(dot(x, w1) + b1)
    h = act(dot(h, w2) + b2)
    value = dot(h, wv) + bv           # (B, 1)
    adv = dot(h, wa) + ba             # (B, A)
    return value + (adv - jnp.mean(adv))


if __name__ == "__main__":
    # DuelingQNetwork(input_dim=16, output_dim=8, activation, hidden_dims=[32, 32])
    INPUT_DIM, OUTPUT_DIM = 16, 8
    HIDDEN_DIMS = [32, 32]

    key = jax.random.PRNGKey(0)
    key, kx1, kx2 = jax.random.split(key, 3)
    params = init_params(key, INPUT_DIM, HIDDEN_DIMS, OUTPUT_DIM)

    # Case 1: relu, batch divides the tile evenly (grid of 2 x 16-row tiles).
    B1 = 32
    x1 = jax.random.normal(kx1, (B1, INPUT_DIM), jnp.float32)
    q1 = jax.block_until_ready(dueling_q_forward(x1, params, "relu", block_b=16))
    assert q1.shape == (B1, OUTPUT_DIM), q1.shape
    ref1_bf = reference_forward(x1, params, "relu", use_bf16=True)
    ref1_f32 = reference_forward(x1, params, "relu", use_bf16=False)
    assert jnp.allclose(q1, ref1_bf, atol=1e-3, rtol=1e-3), (
        f"bf16-matched mismatch: {float(jnp.max(jnp.abs(q1 - ref1_bf)))}")
    assert jnp.allclose(q1, ref1_f32, atol=5e-2, rtol=5e-2), (
        f"f32-reference mismatch: {float(jnp.max(jnp.abs(q1 - ref1_f32)))}")

    # Case 2: tanh, ragged batch (20 rows -> 2 tiles; padding masked in the mean).
    B2 = 20
    x2 = jax.random.normal(kx2, (B2, INPUT_DIM), jnp.float32)
    q2 = jax.block_until_ready(dueling_q_forward(x2, params, "tanh", block_b=16))
    assert q2.shape == (B2, OUTPUT_DIM), q2.shape
    ref2_bf = reference_forward(x2, params, "tanh", use_bf16=True)
    ref2_f32 = reference_forward(x2, params, "tanh", use_bf16=False)
    assert jnp.allclose(q2, ref2_bf, atol=1e-3, rtol=1e-3), (
        f"bf16-matched mismatch: {float(jnp.max(jnp.abs(q2 - ref2_bf)))}")
    assert jnp.allclose(q2, ref2_f32, atol=5e-2, rtol=5e-2), (
        f"f32-reference mismatch: {float(jnp.max(jnp.abs(q2 - ref2_f32)))}")

    print("KERNEL_OK")
</pallas_src>

<mosaic_0001>
module attributes {stable_mosaic.version = 11 : i64} {
  func.func @_dueling_kernel(%arg0: i32, %arg1: memref<16x16xbf16, #tpu.memory_space<vmem>>, %arg2: memref<16x32xbf16, #tpu.memory_space<vmem>>, %arg3: memref<1x32xf32, #tpu.memory_space<vmem>>, %arg4: memref<32x32xbf16, #tpu.memory_space<vmem>>, %arg5: memref<1x32xf32, #tpu.memory_space<vmem>>, %arg6: memref<32x9xbf16, #tpu.memory_space<vmem>>, %arg7: memref<1x9xf32, #tpu.memory_space<vmem>>, %arg8: memref<16x8xf32, #tpu.memory_space<vmem>>, %arg9: memref<1x8x128xf32, #tpu.memory_space<vmem>>) attributes {dimension_semantics = [#tpu.dimension_semantics<parallel>], iteration_bounds = array<i64: 2>, scalar_prefetch = 0 : i64, scratch_operands = 0 : i64, tpu.core_type = #tpu.core_type<tc>, window_params = [{transform_indices = @transform_0, window_bounds = array<i64: 16, 16>}, {pipeline_mode = #tpu.pipeline_mode<synchronous>, transform_indices = @transform_1, window_bounds = array<i64: 16, 32>}, {pipeline_mode = #tpu.pipeline_mode<synchronous>, transform_indices = @transform_2, window_bounds = array<i64: 1, 32>}, {pipeline_mode = #tpu.pipeline_mode<synchronous>, transform_indices = @transform_3, window_bounds = array<i64: 32, 32>}, {pipeline_mode = #tpu.pipeline_mode<synchronous>, transform_indices = @transform_4, window_bounds = array<i64: 1, 32>}, {pipeline_mode = #tpu.pipeline_mode<synchronous>, transform_indices = @transform_5, window_bounds = array<i64: 32, 9>}, {pipeline_mode = #tpu.pipeline_mode<synchronous>, transform_indices = @transform_6, window_bounds = array<i64: 1, 9>}, {transform_indices = @transform_7, window_bounds = array<i64: 16, 8>}, {transform_indices = @transform_8, window_bounds = array<i64: 1, 8, 128>}]} {
    %c0 = arith.constant 0 : index
    %c0_0 = arith.constant 0 : index
    %0 = vector.load %arg1[%c0, %c0_0] : memref<16x16xbf16, #tpu.memory_space<vmem>>, vector<16x16xbf16>
    %c0_1 = arith.constant 0 : index
    %c0_2 = arith.constant 0 : index
    %1 = vector.load %arg2[%c0_1, %c0_2] : memref<16x32xbf16, #tpu.memory_space<vmem>>, vector<16x32xbf16>
    %cst = arith.constant dense<0.000000e+00> : vector<16x32xf32>
    %2 = tpu.matmul %0, %1, %cst {dimension_numbers = #tpu.dot_dimension_numbers<[1], [0], [0], [1], [0, 0, 1, 1], [], []>} : vector<16x16xbf16>, vector<16x32xbf16>, vector<16x32xf32> -> vector<16x32xf32>
    %c0_3 = arith.constant 0 : index
    %c0_4 = arith.constant 0 : index
    %3 = vector.load %arg3[%c0_3, %c0_4] : memref<1x32xf32, #tpu.memory_space<vmem>>, vector<1x32xf32>
    %4 = vector.broadcast %3 : vector<1x32xf32> to vector<16x32xf32>
    %5 = arith.addf %2, %4 : vector<16x32xf32>
    %cst_5 = arith.constant 0.000000e+00 : f32
    %6 = vector.broadcast %cst_5 : f32 to vector<16x32xf32>
    %7 = arith.maximumf %5, %6 : vector<16x32xf32>
    %8 = arith.truncf %7 : vector<16x32xf32> to vector<16x32xbf16>
    %c0_6 = arith.constant 0 : index
    %c0_7 = arith.constant 0 : index
    %9 = vector.load %arg4[%c0_6, %c0_7] : memref<32x32xbf16, #tpu.memory_space<vmem>>, vector<32x32xbf16>
    %cst_8 = arith.constant dense<0.000000e+00> : vector<16x32xf32>
    %10 = tpu.matmul %8, %9, %cst_8 {dimension_numbers = #tpu.dot_dimension_numbers<[1], [0], [0], [1], [0, 0, 1, 1], [], []>} : vector<16x32xbf16>, vector<32x32xbf16>, vector<16x32xf32> -> vector<16x32xf32>
    %c0_9 = arith.constant 0 : index
    %c0_10 = arith.constant 0 : index
    %11 = vector.load %arg5[%c0_9, %c0_10] : memref<1x32xf32, #tpu.memory_space<vmem>>, vector<1x32xf32>
    %12 = vector.broadcast %11 : vector<1x32xf32> to vector<16x32xf32>
    %13 = arith.addf %10, %12 : vector<16x32xf32>
    %cst_11 = arith.constant 0.000000e+00 : f32
    %14 = vector.broadcast %cst_11 : f32 to vector<16x32xf32>
    %15 = arith.maximumf %13, %14 : vector<16x32xf32>
    %16 = arith.truncf %15 : vector<16x32xf32> to vector<16x32xbf16>
    %c0_12 = arith.constant 0 : index
    %c0_13 = arith.constant 0 : index
    %17 = vector.load %arg6[%c0_12, %c0_13] : memref<32x9xbf16, #tpu.memory_space<vmem>>, vector<32x9xbf16>
    %cst_14 = arith.constant dense<0.000000e+00> : vector<16x9xf32>
    %18 = tpu.matmul %16, %17, %cst_14 {dimension_numbers = #tpu.dot_dimension_numbers<[1], [0], [0], [1], [0, 0, 1, 1], [], []>} : vector<16x32xbf16>, vector<32x9xbf16>, vector<16x9xf32> -> vector<16x9xf32>
    %c0_15 = arith.constant 0 : index
    %c0_16 = arith.constant 0 : index
    %19 = vector.load %arg7[%c0_15, %c0_16] : memref<1x9xf32, #tpu.memory_space<vmem>>, vector<1x9xf32>
    %20 = vector.broadcast %19 : vector<1x9xf32> to vector<16x9xf32>
    %21 = arith.addf %18, %20 : vector<16x9xf32>
    %22 = vector.extract_strided_slice %21 {offsets = [0, 0], sizes = [16, 8], strides = [1, 1]} : vector<16x9xf32> to vector<16x8xf32>
    %23 = vector.extract_strided_slice %21 {offsets = [0, 8], sizes = [16, 1], strides = [1, 1]} : vector<16x9xf32> to vector<16x1xf32>
    %24 = vector.broadcast %23 : vector<16x1xf32> to vector<16x8xf32>
    %25 = arith.addf %24, %22 : vector<16x8xf32>
    %c0_17 = arith.constant 0 : index
    %c0_18 = arith.constant 0 : index
    %26 = vector.load %arg8[%c0_17, %c0_18] : memref<16x8xf32, #tpu.memory_space<vmem>>, vector<16x8xf32>
    tpu.vector_store %arg8[%c0_17, %c0_18], %25 {strides = array<i32>} : memref<16x8xf32, #tpu.memory_space<vmem>>, vector<16x8xf32>,
    %c16_i32 = arith.constant 16 : i32
    %27 = arith.muli %arg0, %c16_i32 : i32
    %28 = tpu.iota {dimensions = array<i32: 0>} : vector<16x1xi32>
    %29 = vector.broadcast %27 : i32 to vector<16x1xi32>
    %30 = arith.addi %29, %28 : vector<16x1xi32>
    %c32_i32 = arith.constant 32 : i32
    %31 = vector.broadcast %c32_i32 : i32 to vector<16x1xi32>
    %32 = arith.cmpi slt, %30, %31 : vector<16x1xi32>
    %cst_19 = arith.constant 0.000000e+00 : f32
    %33 = vector.shape_cast %32 : vector<16x1xi1> to vector<16x1xi1>
    %34 = vector.broadcast %33 : vector<16x1xi1> to vector<16x8xi1>
    %35 = vector.broadcast %cst_19 : f32 to vector<16x8xf32>
    %36 = arith.select %34, %22, %35 : vector<16x8xi1>, vector<16x8xf32>
    %37 = vector.shape_cast %36 : vector<16x8xf32> to vector<1x16x8xf32>
    %cst_20 = arith.constant dense<0.000000e+00> : vector<1xf32>
    %38 = vector.multi_reduction <add>, %37, %cst_20 [1, 2] : vector<1x16x8xf32> to vector<1xf32>
    %39 = vector.shape_cast %38 : vector<1xf32> to vector<1x1x1xf32>
    %40 = vector.extract %39[0, 0, 0] : f32 from vector<1x1x1xf32>
    %41 = vector.broadcast %40 : f32 to vector<1x8x128xf32>
    %c0_21 = arith.constant 0 : index
    %c0_22 = arith.constant 0 : index
    %c0_23 = arith.constant 0 : index
    %42 = vector.load %arg9[%c0_21, %c0_22, %c0_23] : memref<1x8x128xf32, #tpu.memory_space<vmem>>, vector<1x8x128xf32>
    tpu.vector_store %arg9[%c0_21, %c0_22, %c0_23], %41 {strides = array<i32>} : memref<1x8x128xf32, #tpu.memory_space<vmem>>, vector<1x8x128xf32>,
    return
  }
  func.func @transform_0(%arg0: i32) -> (i32, i32) {
    %c0_i32 = arith.constant 0 : i32
    %c0_i32_0 = arith.constant 0 : i32
    return %arg0, %c0_i32 : i32, i32
  }
  func.func @transform_1(%arg0: i32) -> (i32, i32) {
    %c0_i32 = arith.constant 0 : i32
    %c0_i32_0 = arith.constant 0 : i32
    %c0_i32_1 = arith.constant 0 : i32
    return %c0_i32, %c0_i32_0 : i32, i32
  }
  func.func @transform_2(%arg0: i32) -> (i32, i32) {
    %c0_i32 = arith.constant 0 : i32
    %c0_i32_0 = arith.constant 0 : i32
    %c0_i32_1 = arith.constant 0 : i32
    return %c0_i32, %c0_i32_0 : i32, i32
  }
  func.func @transform_3(%arg0: i32) -> (i32, i32) {
    %c0_i32 = arith.constant 0 : i32
    %c0_i32_0 = arith.constant 0 : i32
    %c0_i32_1 = arith.constant 0 : i32
    return %c0_i32, %c0_i32_0 : i32, i32
  }
  func.func @transform_4(%arg0: i32) -> (i32, i32) {
    %c0_i32 = arith.constant 0 : i32
    %c0_i32_0 = arith.constant 0 : i32
    %c0_i32_1 = arith.constant 0 : i32
    return %c0_i32, %c0_i32_0 : i32, i32
  }
  func.func @transform_5(%arg0: i32) -> (i32, i32) {
    %c0_i32 = arith.constant 0 : i32
    %c0_i32_0 = arith.constant 0 : i32
    %c0_i32_1 = arith.constant 0 : i32
    return %c0_i32, %c0_i32_0 : i32, i32
  }
  func.func @transform_6(%arg0: i32) -> (i32, i32) {
    %c0_i32 = arith.constant 0 : i32
    %c0_i32_0 = arith.constant 0 : i32
    %c0_i32_1 = arith.constant 0 : i32
    return %c0_i32, %c0_i32_0 : i32, i32
  }
  func.func @transform_7(%arg0: i32) -> (i32, i32) {
    %c0_i32 = arith.constant 0 : i32
    %c0_i32_0 = arith.constant 0 : i32
    return %arg0, %c0_i32 : i32, i32
  }
  func.func @transform_8(%arg0: i32) -> (i32, i32, i32) {
    %c0_i32 = arith.constant 0 : i32
    %c0_i32_0 = arith.constant 0 : i32
    %c0_i32_1 = arith.constant 0 : i32
    return %arg0, %c0_i32, %c0_i32_0 : i32, i32, i32
  }
}

</mosaic_0001>

<llo_original>
// kernel: tpu_custom_call.1
$region0: #{tpu_custom_call.1}
  #allocation0 [shape = 'u32[]', space=smem, size = 0x4, offset = 0x4, fixed_abs, tag = 'smem constant byte address 0x4 - core index']
  #allocation1 [shape = 'u32[144,128]{1,0:T(1,128)}', space=vmem, size = 0x12000, scoped, tag = 'internal scratch']
  %s0 = inlined_call_operand.vmem [shape: bf16[32,16], index: 0, kind: input, shape index: {}]
  %s1 = inlined_call_operand.vmem [shape: bf16[16,32], index: 1, kind: input, shape index: {}]
  %s2 = inlined_call_operand.vmem [shape: f32[1,32], index: 2, kind: input, shape index: {}]
  %s3 = inlined_call_operand.vmem [shape: bf16[32,32], index: 3, kind: input, shape index: {}]
  %s4 = inlined_call_operand.vmem [shape: f32[1,32], index: 4, kind: input, shape index: {}]
  %s5 = inlined_call_operand.vmem [shape: bf16[32,9], index: 5, kind: input, shape index: {}]
  %s6 = inlined_call_operand.vmem [shape: f32[1,9], index: 6, kind: input, shape index: {}]
  %s7 = inlined_call_operand.vmem [shape: f32[32,8], index: 7, kind: output, shape index: {0}]
  %s8 = inlined_call_operand.hbm [shape: f32[2,8,128], index: 8, kind: output, shape index: {1}]
  %9 = xla_tuple %s7, %s8
  %s10 = sld [smem:[#allocation0]]
  $region69: #{tpu_custom_call.1} parent=0
    _
  %s12 = ssub.s32 1, %s10
  %s13 = scalar_select 0, %s12, %s10
  $region1: #{tpu_custom_call.1} parent=0
    #allocation2 [shape = 'u8[8192]{0}', space=vmem, size = 0x2000, scoped, tag = 'output window, operand 1']
    #allocation3 [shape = 's32[2]{0}', space=sflag, size = 0x8, scoped, tag = 'scoped memory for tpu_custom_call.1']
    %14 = vsyncpa [#allocation3], 0
    %s15 = scalar_lea.sflag [#allocation3], 1
    %16 = vsyncpa %s15, 0
    loop: start=0, step=1, limit=4
    $region2: #{tpu_custom_call.1} parent=1 // loop_pre_header
      _
    $region3: #{tpu_custom_call.1} parent=1 // loop_header
      %s18 = sphi 0, %s22
      %p19 = scmp.ge.s32.totalorder %s18, 4
      %s28 = sphi 0, %s30
      %s31 = sphi 0, %s28
      %s32 = sphi 0, %s31
      %s48 = sphi 0, %s32
      %s52 = sphi 0, %s52
      %s54 = sphi 0, %s52
      %s55 = sphi 0, %s54
      %s69 = sphi 0, %s55
      %s73 = sphi 0, %s73
      %s75 = sphi 0, %s73
      %s76 = sphi 0, %s75
      %s90 = sphi 0, %s76
      %s94 = sphi 0, %s94
      %s96 = sphi 0, %s94
      %s97 = sphi 0, %s96
      %s111 = sphi 0, %s97
      %s115 = sphi 0, %s115
      %s117 = sphi 0, %s115
      %s118 = sphi 0, %s117
      %s132 = sphi 0, %s118
      %s136 = sphi 0, %s136
      %s138 = sphi 0, %s136
      %s139 = sphi 0, %s138
      %s153 = sphi 0, %s139
      %s157 = sphi 0, %s157
      %s159 = sphi 0, %s157
      %s160 = sphi 0, %s159
      %s174 = sphi 0, %s160
      %s180 = sphi 0, %s182
      %s183 = sphi 0, %s180
      %s184 = sphi 0, %s183
      %s200 = sphi 0, %s184
      %s206 = sphi 0, %s208
      %s209 = sphi 0, %s206
      %s210 = sphi 0, %s209
      %s226 = sphi 0, %s210
    $region4: #{tpu_custom_call.1} parent=1 // loop_header_branch
      %21 = sbr.rel (%p19) target = $region8
    $region5: #{tpu_custom_call.1} parent=1 // loop_body
      %s23 = ssub.s32 %s18, 1
      %s24 = ssub.s32 %s18, 2
      %s25 = sadd.s32 %s18, 1
      %s26 = ssub.s32 %s18, %s25
      %p27 = scmp.eq.s32.totalorder %s26, 0
      %s29 = sadd.s32 %s28, 1
      %s30 = scalar_select %p27, %s28, %s29
      %p33 = pneg %p27
      %p34 = scmp.eq.s32.totalorder %s18, 1
      %p35 = por %p33, %p34
      %p36 = scmp.ne.s32.totalorder %s28, %s31
      %p37 = scmp.eq.s32.totalorder %s18, 0
      %p38 = por %p36, %p37
      %p39 = scmp.ne.s32.totalorder %s28, %s31
      %p40 = scmp.eq.s32.totalorder %s23, 1
      %p41 = por %p39, %p40
      %p42 = scmp.ne.s32.totalorder %s31, %s32
      %p43 = scmp.eq.s32.totalorder %s23, 0
      %p44 = por %p42, %p43
      %p45 = scmp.ne.s32.totalorder %s31, %s32
      %p46 = scmp.eq.s32.totalorder %s24, 1
      %p47 = por %p45, %p46
      %p49 = scmp.ne.s32.totalorder %s32, %s48
      %p50 = scmp.eq.s32.totalorder %s24, 0
      %p51 = por %p49, %p50
      %s53 = sadd.s32 %s52, 1
      %p56 = scmp.eq.s32.totalorder %s18, 1
      %p57 = scmp.ne.s32.totalorder %s52, %s54
      %p58 = scmp.eq.s32.totalorder %s18, 0
      %p59 = por %p57, %p58
      %p60 = scmp.ne.s32.totalorder %s52, %s54
      %p61 = scmp.eq.s32.totalorder %s23, 1
      %p62 = por %p60, %p61
      %p63 = scmp.ne.s32.totalorder %s54, %s55
      %p64 = scmp.eq.s32.totalorder %s23, 0
      %p65 = por %p63, %p64
      %p66 = scmp.ne.s32.totalorder %s54, %s55
      %p67 = scmp.eq.s32.totalorder %s24, 1
      %p68 = por %p66, %p67
      %p70 = scmp.ne.s32.totalorder %s55, %s69
      %p71 = scmp.eq.s32.totalorder %s24, 0
      %p72 = por %p70, %p71
      %s74 = sadd.s32 %s73, 1
      %p77 = scmp.eq.s32.totalorder %s18, 1
      %p78 = scmp.ne.s32.totalorder %s73, %s75
      %p79 = scmp.eq.s32.totalorder %s18, 0
      %p80 = por %p78, %p79
      %p81 = scmp.ne.s32.totalorder %s73, %s75
      %p82 = scmp.eq.s32.totalorder %s23, 1
      %p83 = por %p81, %p82
      %p84 = scmp.ne.s32.totalorder %s75, %s76
      %p85 = scmp.eq.s32.totalorder %s23, 0
      %p86 = por %p84, %p85
      %p87 = scmp.ne.s32.totalorder %s75, %s76
      %p88 = scmp.eq.s32.totalorder %s24, 1
      %p89 = por %p87, %p88
      %p91 = scmp.ne.s32.totalorder %s76, %s90
      %p92 = scmp.eq.s32.totalorder %s24, 0
      %p93 = por %p91, %p92
      %s95 = sadd.s32 %s94, 1
      %p98 = scmp.eq.s32.totalorder %s18, 1
      %p99 = scmp.ne.s32.totalorder %s94, %s96
      %p100 = scmp.eq.s32.totalorder %s18, 0
      %p101 = por %p99, %p100
      %p102 = scmp.ne.s32.totalorder %s94, %s96
      %p103 = scmp.eq.s32.totalorder %s23, 1
      %p104 = por %p102, %p103
      %p105 = scmp.ne.s32.totalorder %s96, %s97
      %p106 = scmp.eq.s32.totalorder %s23, 0
      %p107 = por %p105, %p106
      %p108 = scmp.ne.s32.totalorder %s96, %s97
      %p109 = scmp.eq.s32.totalorder %s24, 1
      %p110 = por %p108, %p109
      %p112 = scmp.ne.s32.totalorder %s97, %s111
      %p113 = scmp.eq.s32.totalorder %s24, 0
      %p114 = por %p112, %p113
      %s116 = sadd.s32 %s115, 1
      %p119 = scmp.eq.s32.totalorder %s18, 1
      %p120 = scmp.ne.s32.totalorder %s115, %s117
      %p121 = scmp.eq.s32.totalorder %s18, 0
      %p122 = por %p120, %p121
      %p123 = scmp.ne.s32.totalorder %s115, %s117
      %p124 = scmp.eq.s32.totalorder %s23, 1
      %p125 = por %p123, %p124
      %p126 = scmp.ne.s32.totalorder %s117, %s118
      %p127 = scmp.eq.s32.totalorder %s23, 0
      %p128 = por %p126, %p127
      %p129 = scmp.ne.s32.totalorder %s117, %s118
      %p130 = scmp.eq.s32.totalorder %s24, 1
      %p131 = por %p129, %p130
      %p133 = scmp.ne.s32.totalorder %s118, %s132
      %p134 = scmp.eq.s32.totalorder %s24, 0
      %p135 = por %p133, %p134
      %s137 = sadd.s32 %s136, 1
      %p140 = scmp.eq.s32.totalorder %s18, 1
      %p141 = scmp.ne.s32.totalorder %s136, %s138
      %p142 = scmp.eq.s32.totalorder %s18, 0
      %p143 = por %p141, %p142
      %p144 = scmp.ne.s32.totalorder %s136, %s138
      %p145 = scmp.eq.s32.totalorder %s23, 1
      %p146 = por %p144, %p145
      %p147 = scmp.ne.s32.totalorder %s138, %s139
      %p148 = scmp.eq.s32.totalorder %s23, 0
      %p149 = por %p147, %p148
      %p150 = scmp.ne.s32.totalorder %s138, %s139
      %p151 = scmp.eq.s32.totalorder %s24, 1
      %p152 = por %p150, %p151
      %p154 = scmp.ne.s32.totalorder %s139, %s153
      %p155 = scmp.eq.s32.totalorder %s24, 0
      %p156 = por %p154, %p155
      %s158 = sadd.s32 %s157, 1
      %p161 = scmp.eq.s32.totalorder %s18, 1
      %p162 = scmp.ne.s32.totalorder %s157, %s159
      %p163 = scmp.eq.s32.totalorder %s18, 0
      %p164 = por %p162, %p163
      %p165 = scmp.ne.s32.totalorder %s157, %s159
      %p166 = scmp.eq.s32.totalorder %s23, 1
      %p167 = por %p165, %p166
      %p168 = scmp.ne.s32.totalorder %s159, %s160
      %p169 = scmp.eq.s32.totalorder %s23, 0
      %p170 = por %p168, %p169
      %p171 = scmp.ne.s32.totalorder %s159, %s160
      %p172 = scmp.eq.s32.totalorder %s24, 1
      %p173 = por %p171, %p172
      %p175 = scmp.ne.s32.totalorder %s160, %s174
      %p176 = scmp.eq.s32.totalorder %s24, 0
      %p177 = por %p175, %p176
      %s178 = ssub.s32 %s18, %s25
      %p179 = scmp.eq.s32.totalorder %s178, 0
      %s181 = sadd.s32 %s180, 1
      %s182 = scalar_select %p179, %s180, %s181
      %p185 = pneg %p179
      %p186 = scmp.eq.s32.totalorder %s18, 1
      %p187 = por %p185, %p186
      %p188 = scmp.ne.s32.totalorder %s180, %s183
      %p189 = scmp.eq.s32.totalorder %s18, 0
      %p190 = por %p188, %p189
      %p191 = scmp.ne.s32.totalorder %s180, %s183
      %p192 = scmp.eq.s32.totalorder %s23, 1
      %p193 = por %p191, %p192
      %p194 = scmp.ne.s32.totalorder %s183, %s184
      %p195 = scmp.eq.s32.totalorder %s23, 0
      %p196 = por %p194, %p195
      %p197 = scmp.ne.s32.totalorder %s183, %s184
      %p198 = scmp.eq.s32.totalorder %s24, 1
      %p199 = por %p197, %p198
      %p201 = scmp.ne.s32.totalorder %s184, %s200
      %p202 = scmp.eq.s32.totalorder %s24, 0
      %p203 = por %p201, %p202
      %s204 = ssub.s32 %s18, %s25
      %p205 = scmp.eq.s32.totalorder %s204, 0
      %s207 = sadd.s32 %s206, 1
      %s208 = scalar_select %p205, %s206, %s207
      %p211 = pneg %p205
      %p212 = scmp.eq.s32.totalorder %s18, 1
      %p213 = por %p211, %p212
      %p214 = scmp.ne.s32.totalorder %s206, %s209
      %p215 = scmp.eq.s32.totalorder %s18, 0
      %p216 = por %p214, %p215
      %p217 = scmp.ne.s32.totalorder %s206, %s209
      %p218 = scmp.eq.s32.totalorder %s23, 1
      %p219 = por %p217, %p218
      %p220 = scmp.ne.s32.totalorder %s209, %s210
      %p221 = scmp.eq.s32.totalorder %s23, 0
      %p222 = por %p220, %p221
      %p223 = scmp.ne.s32.totalorder %s209, %s210
      %p224 = scmp.eq.s32.totalorder %s24, 1
      %p225 = por %p223, %p224
      %p227 = scmp.ne.s32.totalorder %s210, %s226
      %p228 = scmp.eq.s32.totalorder %s24, 0
      %p229 = por %p227, %p228
      %p230 = scmp.le.s32.totalorder 1, %s18
      %p231 = scmp.lt.s32.totalorder %s18, 3
      %p232 = pnand %p230, %p231
      %p233 = pneg %p232
      // Predicated region
      $region9: #{tpu_custom_call.1} parent=5 // pred_check
        _
      $region10: #{tpu_custom_call.1} parent=5 // pred_check_branch
        %235 = sbr.rel (%p232) target = $region12
      $region11: #{tpu_custom_call.1} parent=5 // pred_region
        %s236 = ssub.s32 %s18, 1
        // Predicated region
        $region13: #{tpu_custom_call.1} parent=11 // pred_check
          %p237 = pneg %p65
        $region14: #{tpu_custom_call.1} parent=11 // pred_check_branch
          %239 = sbr.rel (%p237) target = $region16
        $region15: #{tpu_custom_call.1} parent=11 // pred_region
          _
        $region16: #{tpu_custom_call.1} parent=11 // pred_fallthru
          _
        // Predicated region
        $region17: #{tpu_custom_call.1} parent=11 // pred_check
          %p240 = pneg %p86
        $region18: #{tpu_custom_call.1} parent=11 // pred_check_branch
          %242 = sbr.rel (%p240) target = $region20
        $region19: #{tpu_custom_call.1} parent=11 // pred_region
          _
        $region20: #{tpu_custom_call.1} parent=11 // pred_fallthru
          _
        // Predicated region
        $region21: #{tpu_custom_call.1} parent=11 // pred_check
          %p243 = pneg %p107
        $region22: #{tpu_custom_call.1} parent=11 // pred_check_branch
          %245 = sbr.rel (%p243) target = $region24
        $region23: #{tpu_custom_call.1} parent=11 // pred_region
          _
        $region24: #{tpu_custom_call.1} parent=11 // pred_fallthru
          _
        // Predicated region
        $region25: #{tpu_custom_call.1} parent=11 // pred_check
          %p246 = pneg %p128
        $region26: #{tpu_custom_call.1} parent=11 // pred_check_branch
          %248 = sbr.rel (%p246) target = $region28
        $region27: #{tpu_custom_call.1} parent=11 // pred_region
          _
        $region28: #{tpu_custom_call.1} parent=11 // pred_fallthru
          _
        // Predicated region
        $region29: #{tpu_custom_call.1} parent=11 // pred_check
          %p249 = pneg %p149
        $region30: #{tpu_custom_call.1} parent=11 // pred_check_branch
          %251 = sbr.rel (%p249) target = $region32
        $region31: #{tpu_custom_call.1} parent=11 // pred_region
          _
        $region32: #{tpu_custom_call.1} parent=11 // pred_fallthru
          _
        // Predicated region
        $region33: #{tpu_custom_call.1} parent=11 // pred_check
          %p252 = pneg %p170
        $region34: #{tpu_custom_call.1} parent=11 // pred_check_branch
          %254 = sbr.rel (%p252) target = $region36
        $region35: #{tpu_custom_call.1} parent=11 // pred_region
          _
        $region36: #{tpu_custom_call.1} parent=11 // pred_fallthru
          _
      $region12: #{tpu_custom_call.1} parent=5 // pred_fallthru
        _
      %p255 = scmp.lt.s32.totalorder %s18, 2
      // Predicated region
      $region37: #{tpu_custom_call.1} parent=5 // pred_check
        %p256 = pneg %p255
      $region38: #{tpu_custom_call.1} parent=5 // pred_check_branch
        %258 = sbr.rel (%p256) target = $region40
      $region39: #{tpu_custom_call.1} parent=5 // pred_region
        // Predicated region
        $region41: #{tpu_custom_call.1} parent=39 // pred_check
          %p259 = pneg %p38
        $region42: #{tpu_custom_call.1} parent=39 // pred_check_branch
          %261 = sbr.rel (%p259) target = $region44
        $region43: #{tpu_custom_call.1} parent=39 // pred_region
          %s262 = smul.u32 2, %s18
          %p263 = scmp.lt.s32.totalorder %s262, 3
          %s264 = scalar_select %p263, %s262, 3
          %s265 = smul.addr %s264, 4
          %s266 = scalar_lea.vmem %s0, %s265
          %s267 = smul.u32 2, %s18
        $region44: #{tpu_custom_call.1} parent=39 // pred_fallthru
          _
      $region40: #{tpu_custom_call.1} parent=5 // pred_fallthru
        _
      %p268 = scmp.le.s32.totalorder 1, %s18
      %p269 = scmp.lt.s32.totalorder %s18, 3
      %p270 = pnand %p268, %p269
      %p271 = pneg %p270
      // Predicated region
      $region45: #{tpu_custom_call.1} parent=5 // pred_check
        _
      $region46: #{tpu_custom_call.1} parent=5 // pred_check_branch
        %273 = sbr.rel (%p270) target = $region48
      $region47: #{tpu_custom_call.1} parent=5 // pred_region
        %s274 = ssub.s32 %s18, 1
        %s275 = smul.u32 2, %s23
        %p276 = scmp.lt.s32.totalorder %s275, 3
        %s277 = scalar_select %p276, %s275, 3
        %s278 = smul.addr %s277, 4
        %s279 = scalar_lea.vmem %s0, %s278
        %p280 = pneg %p44
        %p281 = pneg %p41
        %p282 = pneg %p65
        %p283 = pneg %p62
        %p284 = pneg %p86
        %p285 = pneg %p83
        %p286 = pneg %p107
        %p287 = pneg %p104
        %p288 = pneg %p128
        %p289 = pneg %p125
        %p290 = pneg %p149
        %p291 = pneg %p146
        %p292 = pneg %p170
        %p293 = pneg %p167
        %p294 = pneg %p196
        %p295 = pneg %p193
        %s296 = smul.u32 2, %s23
        %p297 = scmp.lt.s32.totalorder %s296, 3
        %s298 = scalar_select %p297, %s296, 3
        %s299 = smul.addr %s298, 8
        %s300 = scalar_lea.vmem %s7, %s299
        %p301 = pneg %p222
        %p302 = pneg %p219
        %s303 = sand.u32 %s209, 1
        %s304 = scalar_lea.sflag [#allocation3], %s303
        %s305 = sand.u32 %s209, 1
        %s306 = smul.addr %s305, 8
        %s307 = scalar_lea.vmem [#allocation2], %s306
        %s308 = smul.u32 2, %s23
        %p309 = scmp.lt.s32.totalorder %s308, 3
        %s310 = scalar_select %p309, %s308, 3
        %s311 = smul.addr %s310, 4
        %s312 = scalar_lea.vmem %s0, %s311
        %s313 = smul.u32 2, %s23
        %s314 = smul.u32 2, %s23
        %p315 = scmp.lt.s32.totalorder %s314, 3
        %s316 = scalar_select %p315, %s314, 3
        %s317 = smul.addr %s316, 8
        %s318 = scalar_lea.vmem %s7, %s317
        %s319 = smul.u32 2, %s23
        %v321 = vld [vmem:[%s312] sm:$0xf]
        %v322 = vld [vmem:[%s312 + $0x4] sm:$0xf]
        %v323 = vld [vmem:[%s1] sm:$0xf]
        %v324 = vld [vmem:[%s1 + $0x4] sm:$0xf]
        %v325 = vld [vmem:[%s2] sm:$0x1]
        %v327 = vlaneseq
        %v328 = vshrl.u32 %v327, 7
        %v329 = vsub.s32 0, %v328
        %v330 = vrot.slane %v325, %v329
        %v334 = vunpack.c.l.b16 %v321
        %v335 = vunpack.c.l.b16 %v322
        %v336 = vpack.c.b16 %v335, %v334
        %v339 = vunpack.c.l.b16 %v323
        %v340 = vunpack.c.l.b16 %v324
        %v341 = vpack.c.b16 %v340, %v339
        %vm343 = vcmask 130048
        %v345 = vsel %vm343, %v336, 0
        %347 = vmatprep.subr.bf16.mxu0 0
        %348 = vmatpush1.bf16.msra.mxu0 %v341
        %349 = vmatprep.subr.bf16.mxu0 0
        %350 = vmatpush1.bf16.msra.mxu0 0
        %351 = vmatprep.subr.bf16.mxu0 0
        %352 = vmatpush1.bf16.msra.mxu0 0
        %353 = vmatprep.subr.bf16.mxu0 0
        %354 = vmatpush1.bf16.msra.mxu0 0
        %355 = vmatprep.subr.bf16.mxu0 0
        %356 = vmatpush1.bf16.msra.mxu0 0
        %357 = vmatprep.subr.bf16.mxu0 0
        %358 = vmatpush1.bf16.msra.mxu0 0
        %359 = vmatprep.subr.bf16.mxu0 0
        %360 = vmatpush1.bf16.msra.mxu0 0
        %361 = vmatprep.subr.bf16.mxu0 0
        %362 = vmatpush1.bf16.msra.mxu0 0
        %363 = vmatprep.subr.bf16.mxu0 0
        %364 = vmatpush1.bf16.msra.mxu0 0
        %365 = vmatprep.subr.bf16.mxu0 0
        %366 = vmatpush1.bf16.msra.mxu0 0
        %367 = vmatprep.subr.bf16.mxu0 0
        %368 = vmatpush1.bf16.msra.mxu0 0
        %369 = vmatprep.subr.bf16.mxu0 0
        %370 = vmatpush1.bf16.msra.mxu0 0
        %371 = vmatprep.subr.bf16.mxu0 0
        %372 = vmatpush1.bf16.msra.mxu0 0
        %373 = vmatprep.subr.bf16.mxu0 0
        %374 = vmatpush1.bf16.msra.mxu0 0
        %375 = vmatprep.subr.bf16.mxu0 0
        %376 = vmatpush1.bf16.msra.mxu0 0
        %377 = vmatprep.subr.bf16.mxu0 0
        %378 = vmatpush1.bf16.msra.mxu0 0
        %379 = vmatprep.mubr.bf16.mxu0 0
        %380 = vmatmul.mubr.bf16.gmra.mrb[0].mxu0 %v345
        %v381 = vpop.f32.mrb[0].mxu0
        %v382 = vadd.f32 %v330, %v381
        %v383 = vpop.f32.mrb[0].mxu0
        %v384 = vpop.f32.mrb[0].mxu0
        %v385 = vadd.f32 %v330, %v384
        %v386 = vpop.f32.mrb[0].mxu0
        %387 = vdwg.mxu0
        %v388 = vmax.f32 %v382, 0.0
        %v389 = vmax.f32 %v385, 0.0
        %v390 = vpack.c.bf16 %v389, %v388
        %v391 = vld [vmem:[%s3] sm:$0xf]
        %v392 = vld [vmem:[%s3 + $0x4] sm:$0xf]
        %v393 = vld [vmem:[%s3 + $0x8] sm:$0xf]
        %v394 = vld [vmem:[%s3 + $0xc] sm:$0xf]
        %v395 = vld [vmem:[%s4] sm:$0x1]
        %v397 = vlaneseq
        %v398 = vshrl.u32 %v397, 7
        %v399 = vsub.s32 0, %v398
        %v400 = vrot.slane %v395, %v399
        %v406 = vunpack.c.l.b16 %v391
        %v407 = vunpack.c.l.b16 %v392
        %v408 = vunpack.c.l.b16 %v393
        %v409 = vunpack.c.l.b16 %v394
        %v410 = vpack.c.b16 %v407, %v406
        %v411 = vpack.c.b16 %v409, %v408
        %vm414 = vcmask 261120
        %v416 = vsel %vm414, %v390, 0
        %418 = vmatprep.subr.bf16.mxu0 0
        %419 = vmatpush1.bf16.msra.mxu0 %v410
        %420 = vmatprep.subr.bf16.mxu0 0
        %421 = vmatpush1.bf16.msra.mxu0 %v411
        %422 = vmatprep.subr.bf16.mxu0 0
        %423 = vmatpush1.bf16.msra.mxu0 0
        %424 = vmatprep.subr.bf16.mxu0 0
        %425 = vmatpush1.bf16.msra.mxu0 0
        %426 = vmatprep.subr.bf16.mxu0 0
        %427 = vmatpush1.bf16.msra.mxu0 0
        %428 = vmatprep.subr.bf16.mxu0 0
        %429 = vmatpush1.bf16.msra.mxu0 0
        %430 = vmatprep.subr.bf16.mxu0 0
        %431 = vmatpush1.bf16.msra.mxu0 0
        %432 = vmatprep.subr.bf16.mxu0 0
        %433 = vmatpush1.bf16.msra.mxu0 0
        %434 = vmatprep.subr.bf16.mxu0 0
        %435 = vmatpush1.bf16.msra.mxu0 0
        %436 = vmatprep.subr.bf16.mxu0 0
        %437 = vmatpush1.bf16.msra.mxu0 0
        %438 = vmatprep.subr.bf16.mxu0 0
        %439 = vmatpush1.bf16.msra.mxu0 0
        %440 = vmatprep.subr.bf16.mxu0 0
        %441 = vmatpush1.bf16.msra.mxu0 0
        %442 = vmatprep.subr.bf16.mxu0 0
        %443 = vmatpush1.bf16.msra.mxu0 0
        %444 = vmatprep.subr.bf16.mxu0 0
        %445 = vmatpush1.bf16.msra.mxu0 0
        %446 = vmatprep.subr.bf16.mxu0 0
        %447 = vmatpush1.bf16.msra.mxu0 0
        %448 = vmatprep.subr.bf16.mxu0 0
        %449 = vmatpush1.bf16.msra.mxu0 0
        %450 = vmatprep.mubr.bf16.mxu0 0
        %451 = vmatmul.mubr.bf16.gmra.mrb[0].mxu0 %v416
        %v452 = vpop.f32.mrb[0].mxu0
        %v453 = vadd.f32 %v400, %v452
        %v454 = vpop.f32.mrb[0].mxu0
        %v455 = vpop.f32.mrb[0].mxu0
        %v456 = vadd.f32 %v400, %v455
        %v457 = vpop.f32.mrb[0].mxu0
        %458 = vdwg.mxu0
        %v459 = vmax.f32 %v453, 0.0
        %v460 = vmax.f32 %v456, 0.0
        %v461 = vpack.c.bf16 %v460, %v459
        %v462 = vld [vmem:[%s5] sm:$0xf]
        %v463 = vld [vmem:[%s5 + $0x4] sm:$0xf]
        %v464 = vld [vmem:[%s5 + $0x8] sm:$0xf]
        %v465 = vld [vmem:[%s5 + $0xc] sm:$0xf]
        %v466 = vld [vmem:[%s6] sm:$0x1]
        %v468 = vlaneseq
        %v469 = vshrl.u32 %v468, 7
        %v470 = vsub.s32 0, %v469
        %v471 = vrot.slane %v466, %v470
        %v477 = vunpack.c.l.b16 %v462
        %v478 = vunpack.c.l.b16 %v463
        %v479 = vunpack.c.l.b16 %v464
        %v480 = vunpack.c.l.b16 %v465
        %v481 = vpack.c.b16 %v478, %v477
        %v482 = vpack.c.b16 %v480, %v479
        %v486 = vsel %vm414, %v461, 0
        %488 = vmatprep.subr.bf16.mxu0 0
        %489 = vmatpush1.bf16.msra.mxu0 %v481
        %490 = vmatprep.subr.bf16.mxu0 0
        %491 = vmatpush1.bf16.msra.mxu0 %v482
        %492 = vmatprep.subr.bf16.mxu0 0
        %493 = vmatpush1.bf16.msra.mxu0 0
        %494 = vmatprep.subr.bf16.mxu0 0
        %495 = vmatpush1.bf16.msra.mxu0 0
        %496 = vmatprep.subr.bf16.mxu0 0
        %497 = vmatpush1.bf16.msra.mxu0 0
        %498 = vmatprep.subr.bf16.mxu0 0
        %499 = vmatpush1.bf16.msra.mxu0 0
        %500 = vmatprep.subr.bf16.mxu0 0
        %501 = vmatpush1.bf16.msra.mxu0 0
        %502 = vmatprep.subr.bf16.mxu0 0
        %503 = vmatpush1.bf16.msra.mxu0 0
        %504 = vmatprep.subr.bf16.mxu0 0
        %505 = vmatpush1.bf16.msra.mxu0 0
        %506 = vmatprep.subr.bf16.mxu0 0
        %507 = vmatpush1.bf16.msra.mxu0 0
        %508 = vmatprep.subr.bf16.mxu0 0
        %509 = vmatpush1.bf16.msra.mxu0 0
        %510 = vmatprep.subr.bf16.mxu0 0
        %511 = vmatpush1.bf16.msra.mxu0 0
        %512 = vmatprep.subr.bf16.mxu0 0
        %513 = vmatpush1.bf16.msra.mxu0 0
        %514 = vmatprep.subr.bf16.mxu0 0
        %515 = vmatpush1.bf16.msra.mxu0 0
        %516 = vmatprep.subr.bf16.mxu0 0
        %517 = vmatpush1.bf16.msra.mxu0 0
        %518 = vmatprep.subr.bf16.mxu0 0
        %519 = vmatpush1.bf16.msra.mxu0 0
        %520 = vmatprep.mubr.bf16.mxu0 0
        %521 = vmatmul.mubr.bf16.gmra.mrb[0].mxu0 %v486
        %v522 = vpop.f32.mrb[0].mxu0
        %v523 = vadd.f32 %v471, %v522
        %v524 = vpop.f32.mrb[0].mxu0
        %v525 = vpop.f32.mrb[0].mxu0
        %v526 = vadd.f32 %v471, %v525
        %v527 = vpop.f32.mrb[0].mxu0
        %528 = vdwg.mxu0
        %530 = vset.pattern.permute.xlu0 8
        %531 = vperm.xlu0 %530, %v523
        %v532 = vpop.permute.xlu0 %531
        %535 = vset.pattern.permute.xlu0 8
        %536 = vperm.xlu0 %535, %v526
        %v537 = vpop.permute.xlu0 %536
        %v539 = vadd.f32 %v532, %v523
        %v540 = vadd.f32 %v537, %v526
        %vm541 = vcmask 64512
        %542 = vst.msk [vmem:[%s318] sm:$0xff] %vm541, %v539
        %543 = vst.msk [vmem:[%s318 + $0x8] sm:$0xff] %vm541, %v540
        %s544 = smul.u32 %s23, 16
        %v545 = vlaneseq
        %v546 = vshrl.u32 %v545, 7
        %v547 = vadd.s32 %v546, 8
        %v548 = vstv %s544
        %v549 = vadd.s32 %v548, %v546
        %v550 = vadd.s32 %v548, %v547
        %vm551 = vcmp.lt.s32.totalorder %v549, 32
        %vm552 = vcmp.lt.s32.totalorder %v550, 32
        %v553 = vsel %vm551, 1, 0
        %v554 = vsel %vm552, 1, 0
        %vm555 = vcmp.eq.s32.totalorder %v553, 1
        %vm556 = vcmp.eq.s32.totalorder %v554, 1
        %v557 = vsel %vm555, %v523, 0.0
        %v558 = vsel %vm556, %v526, 0.0
        %v559 = vsel %vm541, %v557, 0.0
        %v560 = vsel %vm541, %v558, 0.0
        %v561 = vadd.f32 %v559, %v560
        %562 = vadd.xlane.f32.xlu0 %v561
        %v563 = vpop.xlane.xlu0 %562
        %v564 = vrot.slane %v563, 4
        %v565 = vadd.f32 %v563, %v564
        %v566 = vrot.slane %v565, 2
        %v567 = vadd.f32 %v565, %v566
        %v568 = vrot.slane %v567, 1
        %v569 = vadd.f32 %v567, %v568
        %s570 = vtos %v569
        %v571 = vstv %s570
        %572 = vst [vmem:[%s307] sm:$0xff] %v571
        %s573 = smul.u32 2, %s23
        %p574 = scmp.lt.s32.totalorder %s573, 3
        %s575 = scalar_select %p574, %s573, 3
        %s576 = smul.addr %s575, 8
        %s577 = scalar_lea.vmem %s7, %s576
        %s578 = sand.u32 %s209, 1
        %s579 = scalar_lea.sflag [#allocation3], %s578
        %s580 = sand.u32 %s209, 1
        %s581 = smul.addr %s580, 8
        %s582 = scalar_lea.vmem [#allocation2], %s581
        // Predicated region
        $region49: #{tpu_custom_call.1} parent=47 // pred_check
          %p583 = pneg %p193
        $region50: #{tpu_custom_call.1} parent=47 // pred_check_branch
          %585 = sbr.rel (%p583) target = $region52
        $region51: #{tpu_custom_call.1} parent=47 // pred_region
          %s586 = smul.u32 2, %s23
        $region52: #{tpu_custom_call.1} parent=47 // pred_fallthru
          _
        // Predicated region
        $region53: #{tpu_custom_call.1} parent=47 // pred_check
          %p587 = pneg %p219
        $region54: #{tpu_custom_call.1} parent=47 // pred_check_branch
          %589 = sbr.rel (%p587) target = $region56
        $region55: #{tpu_custom_call.1} parent=47 // pred_region
          %s591 = ssub.s32 128, 128
          %592 = vsyncadd %s579, %s591
          %s593 = smul.addr %s23, 128
          %s594 = scalar_lea.hbm %s8, %s593
          %s596 = sshll.u32 %s582, 4
          %s597 = int_to_ptr.vmem [resolvable:$true] %s596
          %599 = dma.vmem_to_hbm [thread:$0]  %s597, 128, %s594, %s579
        $region56: #{tpu_custom_call.1} parent=47 // pred_fallthru
          _
      $region48: #{tpu_custom_call.1} parent=5 // pred_fallthru
        _
      %p600 = scmp.le.s32.totalorder 2, %s18
      // Predicated region
      $region57: #{tpu_custom_call.1} parent=5 // pred_check
        %p601 = pneg %p600
      $region58: #{tpu_custom_call.1} parent=5 // pred_check_branch
        %603 = sbr.rel (%p601) target = $region60
      $region59: #{tpu_custom_call.1} parent=5 // pred_region
        %s604 = ssub.s32 %s18, 2
        // Predicated region
        $region61: #{tpu_custom_call.1} parent=59 // pred_check
          %p605 = pneg %p199
        $region62: #{tpu_custom_call.1} parent=59 // pred_check_branch
          %607 = sbr.rel (%p605) target = $region64
        $region63: #{tpu_custom_call.1} parent=59 // pred_region
          %s608 = smul.u32 2, %s24
          %p609 = scmp.lt.s32.totalorder %s608, 3
          %s610 = scalar_select %p609, %s608, 3
          %s611 = smul.addr %s610, 8
          %s612 = scalar_lea.vmem %s7, %s611
        $region64: #{tpu_custom_call.1} parent=59 // pred_fallthru
          _
        // Predicated region
        $region65: #{tpu_custom_call.1} parent=59 // pred_check
          %p613 = pneg %p225
        $region66: #{tpu_custom_call.1} parent=59 // pred_check_branch
          %615 = sbr.rel (%p613) target = $region68
        $region67: #{tpu_custom_call.1} parent=59 // pred_region
          %s616 = sand.u32 %s210, 1
          %s617 = scalar_lea.sflag [#allocation3], %s616
          %s618 = sand.u32 %s210, 1
          %s619 = smul.addr %s618, 8
          %s620 = scalar_lea.vmem [#allocation2], %s619
          %621 = dma.done %s617, 128
        $region68: #{tpu_custom_call.1} parent=59 // pred_fallthru
          _
      $region60: #{tpu_custom_call.1} parent=5 // pred_fallthru
        _
    $region6: #{tpu_custom_call.1} parent=1 // loop_footer
      %s22 = sadd.s32 1, %s18
    $region7: #{tpu_custom_call.1} parent=1 // loop_footer_branch
      %17 = sbr.rel target = $region3
    $region8: #{tpu_custom_call.1} parent=1 // loop_exit
      _
    %622 = vsyncpa [#allocation3], 1
    %s623 = scalar_lea.sflag [#allocation3], 1
    %624 = vsyncpa %s623, 1

</llo_original>
